<compile_context>
chip_gen: v6e
topology: v6e:2x2x1
jax: 0.10.0
libtpu: 0.0.40
codegen_flags: <defaults>
</compile_context>

<pallas_src>
import jax
import jax.numpy as jnp
from jax.experimental import pallas as pl
from jax.experimental.pallas import tpu as pltpu


def _ra_kernel(rate_ref, x_ref, m_ref, w1_ref, b1_ref, w2_ref, b2_ref, o_ref):
    x = x_ref[...]                                  # (C, t)  channels on sublanes, spatial on lanes
    m_raw = m_ref[...]                              # (1, t)  pre-threshold mask values
    rate = rate_ref[0]                              # f32 scalar from SMEM

    # torch.where(mask >= 1.0, 1.0, rate)
    m = jnp.where(m_raw >= 1.0, jnp.float32(1.0), rate)

    # embedding: Conv2d(C, C//red, 1) -> ReLU -> Conv2d(C//red, C, 1) -> ReLU
    # (per-pixel matmuls; tiny contraction dims under-fill the MXU but this op
    #  is bandwidth-bound, so compute is nowhere near the bottleneck)
    h = jnp.dot(w1_ref[...], x, preferred_element_type=jnp.float32) + b1_ref[...]
    h = jnp.maximum(h, 0.0)
    y = jnp.dot(w2_ref[...], h, preferred_element_type=jnp.float32) + b2_ref[...]
    y = jnp.maximum(y, 0.0)

    # y * mask * x  (fused gating)
    o_ref[...] = (y * m * x).astype(o_ref.dtype)


def _nearest_resize(mask, out_h, out_w):
    # PyTorch F.interpolate(mode='nearest'): src_idx = floor(dst_idx * in/out)
    _, _, in_h, in_w = mask.shape
    idx_h = (jnp.arange(out_h) * in_h // out_h).astype(jnp.int32)
    idx_w = (jnp.arange(out_w) * in_w // out_w).astype(jnp.int32)
    return mask[:, :, idx_h, :][:, :, :, idx_w]


def _round_up(v, m):
    return (v + m - 1) // m * m


def ra_layer_forward(x, mask, w1, b1, w2, b2, rate, *, t_spatial=8192):
    """x: (N, C, H, W) f32 (NCHW). mask: (N, 1, Hm, Wm).
    w1: (Cr, C), b1: (Cr, 1), w2: (C, Cr), b2: (C, 1)  (1x1 Conv2d weights as matrices)."""
    n, c, h, w = x.shape
    cr = w1.shape[0]
    hw = h * w

    # glue: resize mask to x's spatial size, flatten spatial (no transposes)
    mask_r = _nearest_resize(mask.astype(jnp.float32), h, w).reshape(n, 1, hw)
    x_flat = x.reshape(n, c, hw)

    # Lane-dense spatial tile: multiple of 128, as large as the cap allows
    # (amortizes per-step pipeline overhead), sized so zero-padding waste is
    # < 128 elements per tile.  (C=32, t=8192) f32 = 1 MiB/block; x+out+mask
    # double-buffered ~= 4 MiB -> well within scoped VMEM on v5e/v6e/v7x.
    n_tiles = max(1, pl.cdiv(hw, t_spatial))
    t = _round_up(pl.cdiv(hw, n_tiles), 128)
    hw_pad = t * n_tiles
    if hw_pad != hw:
        pad = hw_pad - hw
        x_flat = jnp.pad(x_flat, ((0, 0), (0, 0), (0, pad)))
        mask_r = jnp.pad(mask_r, ((0, 0), (0, 0), (0, pad)))

    rate_arr = jnp.full((1,), rate, dtype=jnp.float32)
    grid = (n, n_tiles)

    out_flat = pl.pallas_call(
        _ra_kernel,
        out_shape=jax.ShapeDtypeStruct((n, c, hw_pad), x.dtype),
        grid_spec=pltpu.PrefetchScalarGridSpec(
            num_scalar_prefetch=0,
            grid=grid,
            in_specs=[
                pl.BlockSpec(memory_space=pltpu.MemorySpace.SMEM),   # rate scalar
                pl.BlockSpec((None, c, t), lambda i, j: (i, 0, j)),  # x tile    (C, t)
                pl.BlockSpec((None, 1, t), lambda i, j: (i, 0, j)),  # mask tile (1, t)
                pl.BlockSpec((cr, c), lambda i, j: (0, 0)),          # W1 (constant index -> resident)
                pl.BlockSpec((cr, 1), lambda i, j: (0, 0)),          # b1
                pl.BlockSpec((c, cr), lambda i, j: (0, 0)),          # W2
                pl.BlockSpec((c, 1), lambda i, j: (0, 0)),           # b2
            ],
            out_specs=pl.BlockSpec((None, c, t), lambda i, j: (i, 0, j)),
        ),
        compiler_params=pltpu.CompilerParams(
            # both axes independent -> shards across the 2 TensorCores on v7x
            dimension_semantics=("parallel", "parallel"),
        ),
    )(rate_arr, x_flat, mask_r, w1, b1, w2, b2)

    return out_flat[:, :, :hw].reshape(n, c, h, w)


def _reference(x, mask, w1, b1, w2, b2, rate):
    n, c, h, w = x.shape
    mask_r = _nearest_resize(mask, h, w)
    m = jnp.where(mask_r >= 1.0, 1.0, rate)                      # (N,1,H,W)
    xf = x.reshape(n, c, h * w)
    hd = jnp.maximum(jnp.einsum('rc,ncp->nrp', w1, xf) + b1[None], 0.0)
    y = jnp.maximum(jnp.einsum('cr,nrp->ncp', w2, hd) + b2[None], 0.0)
    return y.reshape(n, c, h, w) * m * x


if __name__ == "__main__":
    key = jax.random.PRNGKey(0)
    k_x, k_m, k_w1, k_b1, k_w2, k_b2 = jax.random.split(key, 6)

    # in_channel=32, reduction=16 -> hidden=2; rate=0.5
    N, C, H, W = 2, 32, 16, 16
    RED = 16
    CR = C // RED
    RATE = 0.5

    x = jax.random.normal(k_x, (N, C, H, W), dtype=jnp.float32)
    # mask at half resolution, values in [0, 2) so both branches of where() fire
    mask = jax.random.uniform(k_m, (N, 1, H // 2, W // 2), dtype=jnp.float32) * 2.0

    # Conv2d 1x1 kernels as (Cout, Cin) matrices + per-channel column biases
    w1 = jax.random.normal(k_w1, (CR, C), dtype=jnp.float32) * 0.1
    b1 = jax.random.normal(k_b1, (CR, 1), dtype=jnp.float32) * 0.1
    w2 = jax.random.normal(k_w2, (C, CR), dtype=jnp.float32) * 0.1
    b2 = jax.random.normal(k_b2, (C, 1), dtype=jnp.float32) * 0.1

    out = jax.block_until_ready(ra_layer_forward(x, mask, w1, b1, w2, b2, RATE))
    ref = _reference(x, mask, w1, b1, w2, b2, RATE)
    assert out.shape == (N, C, H, W)
    assert jnp.allclose(out, ref, atol=1e-5, rtol=1e-5), "mismatch vs pure-JAX reference"

    # second check: odd spatial size exercises the zero-pad + slice-off path
    H2, W2 = 13, 11
    x2 = jax.random.normal(k_x, (N, C, H2, W2), dtype=jnp.float32)
    mask2 = jax.random.uniform(k_m, (N, 1, 6, 5), dtype=jnp.float32) * 2.0
    out2 = jax.block_until_ready(ra_layer_forward(x2, mask2, w1, b1, w2, b2, RATE))
    ref2 = _reference(x2, mask2, w1, b1, w2, b2, RATE)
    assert out2.shape == (N, C, H2, W2)
    assert jnp.allclose(out2, ref2, atol=1e-5, rtol=1e-5), "mismatch (padded path)"

    print("KERNEL_OK")
</pallas_src>

<mosaic_0001>
module attributes {stable_mosaic.version = 11 : i64} {
  func.func @_ra_kernel(%arg0: i32, %arg1: i32, %arg2: memref<1xf32, #tpu.memory_space<smem>>, %arg3: memref<1x32x256xf32, #tpu.memory_space<vmem>>, %arg4: memref<1x1x256xf32, #tpu.memory_space<vmem>>, %arg5: memref<2x32xf32, #tpu.memory_space<vmem>>, %arg6: memref<2x1xf32, #tpu.memory_space<vmem>>, %arg7: memref<32x2xf32, #tpu.memory_space<vmem>>, %arg8: memref<32x1xf32, #tpu.memory_space<vmem>>, %arg9: memref<1x32x256xf32, #tpu.memory_space<vmem>>) attributes {dimension_semantics = [#tpu.dimension_semantics<parallel>, #tpu.dimension_semantics<parallel>], iteration_bounds = array<i64: 2, 1>, scalar_prefetch = 0 : i64, scratch_operands = 0 : i64, tpu.core_type = #tpu.core_type<tc>, window_params = [{transform_indices = @transform_0, window_bounds = array<i64: 1>}, {transform_indices = @transform_1, window_bounds = array<i64: 1, 32, 256>}, {transform_indices = @transform_2, window_bounds = array<i64: 1, 1, 256>}, {pipeline_mode = #tpu.pipeline_mode<synchronous>, transform_indices = @transform_3, window_bounds = array<i64: 2, 32>}, {pipeline_mode = #tpu.pipeline_mode<synchronous>, transform_indices = @transform_4, window_bounds = array<i64: 2, 1>}, {pipeline_mode = #tpu.pipeline_mode<synchronous>, transform_indices = @transform_5, window_bounds = array<i64: 32, 2>}, {pipeline_mode = #tpu.pipeline_mode<synchronous>, transform_indices = @transform_6, window_bounds = array<i64: 32, 1>}, {transform_indices = @transform_7, window_bounds = array<i64: 1, 32, 256>}]} {
    %c0 = arith.constant 0 : index
    %c0_0 = arith.constant 0 : index
    %c0_1 = arith.constant 0 : index
    %0 = vector.load %arg3[%c0, %c0_0, %c0_1] : memref<1x32x256xf32, #tpu.memory_space<vmem>>, vector<1x32x256xf32>
    %1 = vector.shape_cast %0 : vector<1x32x256xf32> to vector<32x256xf32>
    %c0_2 = arith.constant 0 : index
    %c0_3 = arith.constant 0 : index
    %c0_4 = arith.constant 0 : index
    %2 = vector.load %arg4[%c0_2, %c0_3, %c0_4] : memref<1x1x256xf32, #tpu.memory_space<vmem>>, vector<1x1x256xf32>
    %3 = vector.shape_cast %2 : vector<1x1x256xf32> to vector<1x256xf32>
    %c0_5 = arith.constant 0 : index
    %4 = memref.load %arg2[%c0_5] : memref<1xf32, #tpu.memory_space<smem>>
    %cst = arith.constant 1.000000e+00 : f32
    %5 = vector.broadcast %cst : f32 to vector<1x256xf32>
    %6 = arith.cmpf oge, %3, %5 : vector<1x256xf32>
    %cst_6 = arith.constant 1.000000e+00 : f32
    %7 = vector.broadcast %cst_6 : f32 to vector<1x256xf32>
    %8 = vector.broadcast %4 : f32 to vector<1x256xf32>
    %9 = arith.select %6, %7, %8 : vector<1x256xi1>, vector<1x256xf32>
    %c0_7 = arith.constant 0 : index
    %c0_8 = arith.constant 0 : index
    %10 = vector.load %arg5[%c0_7, %c0_8] : memref<2x32xf32, #tpu.memory_space<vmem>>, vector<2x32xf32>
    %cst_9 = arith.constant dense<0.000000e+00> : vector<2x256xf32>
    %11 = tpu.matmul %10, %1, %cst_9 {dimension_numbers = #tpu.dot_dimension_numbers<[1], [0], [0], [1], [0, 0, 1, 1], [], []>} : vector<2x32xf32>, vector<32x256xf32>, vector<2x256xf32> -> vector<2x256xf32>
    %c0_10 = arith.constant 0 : index
    %c0_11 = arith.constant 0 : index
    %12 = vector.load %arg6[%c0_10, %c0_11] : memref<2x1xf32, #tpu.memory_space<vmem>>, vector<2x1xf32>
    %13 = vector.broadcast %12 : vector<2x1xf32> to vector<2x256xf32>
    %14 = arith.addf %11, %13 : vector<2x256xf32>
    %cst_12 = arith.constant 0.000000e+00 : f32
    %15 = vector.broadcast %cst_12 : f32 to vector<2x256xf32>
    %16 = arith.maximumf %14, %15 : vector<2x256xf32>
    %c0_13 = arith.constant 0 : index
    %c0_14 = arith.constant 0 : index
    %17 = vector.load %arg7[%c0_13, %c0_14] : memref<32x2xf32, #tpu.memory_space<vmem>>, vector<32x2xf32>
    %cst_15 = arith.constant dense<0.000000e+00> : vector<32x256xf32>
    %18 = tpu.matmul %17, %16, %cst_15 {dimension_numbers = #tpu.dot_dimension_numbers<[1], [0], [0], [1], [0, 0, 1, 1], [], []>} : vector<32x2xf32>, vector<2x256xf32>, vector<32x256xf32> -> vector<32x256xf32>
    %c0_16 = arith.constant 0 : index
    %c0_17 = arith.constant 0 : index
    %19 = vector.load %arg8[%c0_16, %c0_17] : memref<32x1xf32, #tpu.memory_space<vmem>>, vector<32x1xf32>
    %20 = vector.broadcast %19 : vector<32x1xf32> to vector<32x256xf32>
    %21 = arith.addf %18, %20 : vector<32x256xf32>
    %cst_18 = arith.constant 0.000000e+00 : f32
    %22 = vector.broadcast %cst_18 : f32 to vector<32x256xf32>
    %23 = arith.maximumf %21, %22 : vector<32x256xf32>
    %24 = vector.broadcast %9 : vector<1x256xf32> to vector<32x256xf32>
    %25 = arith.mulf %23, %24 : vector<32x256xf32>
    %26 = arith.mulf %25, %1 : vector<32x256xf32>
    %c0_19 = arith.constant 0 : index
    %c0_20 = arith.constant 0 : index
    %c0_21 = arith.constant 0 : index
    %27 = vector.load %arg9[%c0_19, %c0_20, %c0_21] : memref<1x32x256xf32, #tpu.memory_space<vmem>>, vector<1x32x256xf32>
    %28 = vector.shape_cast %27 : vector<1x32x256xf32> to vector<32x256xf32>
    %29 = vector.shape_cast %26 : vector<32x256xf32> to vector<1x32x256xf32>
    tpu.vector_store %arg9[%c0_19, %c0_20, %c0_21], %29 {strides = array<i32>} : memref<1x32x256xf32, #tpu.memory_space<vmem>>, vector<1x32x256xf32>,
    return
  }
  func.func @transform_0(%arg0: i32, %arg1: i32) -> i32 {
    %c0_i32 = arith.constant 0 : i32
    %c0_i32_0 = arith.constant 0 : i32
    return %c0_i32 : i32
  }
  func.func @transform_1(%arg0: i32, %arg1: i32) -> (i32, i32, i32) {
    %c0_i32 = arith.constant 0 : i32
    %c0_i32_0 = arith.constant 0 : i32
    return %arg0, %c0_i32, %arg1 : i32, i32, i32
  }
  func.func @transform_2(%arg0: i32, %arg1: i32) -> (i32, i32, i32) {
    %c0_i32 = arith.constant 0 : i32
    %c0_i32_0 = arith.constant 0 : i32
    return %arg0, %c0_i32, %arg1 : i32, i32, i32
  }
  func.func @transform_3(%arg0: i32, %arg1: i32) -> (i32, i32) {
    %c0_i32 = arith.constant 0 : i32
    %c0_i32_0 = arith.constant 0 : i32
    %c0_i32_1 = arith.constant 0 : i32
    return %c0_i32, %c0_i32_0 : i32, i32
  }
  func.func @transform_4(%arg0: i32, %arg1: i32) -> (i32, i32) {
    %c0_i32 = arith.constant 0 : i32
    %c0_i32_0 = arith.constant 0 : i32
    %c0_i32_1 = arith.constant 0 : i32
    return %c0_i32, %c0_i32_0 : i32, i32
  }
  func.func @transform_5(%arg0: i32, %arg1: i32) -> (i32, i32) {
    %c0_i32 = arith.constant 0 : i32
    %c0_i32_0 = arith.constant 0 : i32
    %c0_i32_1 = arith.constant 0 : i32
    return %c0_i32, %c0_i32_0 : i32, i32
  }
  func.func @transform_6(%arg0: i32, %arg1: i32) -> (i32, i32) {
    %c0_i32 = arith.constant 0 : i32
    %c0_i32_0 = arith.constant 0 : i32
    %c0_i32_1 = arith.constant 0 : i32
    return %c0_i32, %c0_i32_0 : i32, i32
  }
  func.func @transform_7(%arg0: i32, %arg1: i32) -> (i32, i32, i32) {
    %c0_i32 = arith.constant 0 : i32
    %c0_i32_0 = arith.constant 0 : i32
    return %arg0, %c0_i32, %arg1 : i32, i32, i32
  }
}

</mosaic_0001>

<llo_original>
// kernel: tpu_custom_call.1
$region0: #{tpu_custom_call.1}
  #allocation0 [shape = 'u32[]', space=smem, size = 0x4, offset = 0x4, fixed_abs, tag = 'smem constant byte address 0x4 - core index']
  #allocation1 [shape = 'u32[144,128]{1,0:T(1,128)}', space=vmem, size = 0x12000, scoped, tag = 'internal scratch']
  #allocation2 [shape = 'f32[1]{0:T(128)S(6)}', space=smem, size = 0x200, scoped, tag = 'scoped memory for tpu_custom_call.1']
  %s0 = inlined_call_operand.<no memory space> [shape: f32[1], index: 0, kind: input, shape index: {}]
  %s1 = inlined_call_operand.hbm [shape: f32[2,32,256], index: 1, kind: input, shape index: {}]
  %s2 = inlined_call_operand.vmem [shape: f32[2,1,256], index: 2, kind: input, shape index: {}]
  %s3 = inlined_call_operand.vmem [shape: f32[2,32], index: 3, kind: input, shape index: {}]
  %s4 = inlined_call_operand.vmem [shape: f32[2,1], index: 4, kind: input, shape index: {}]
  %s5 = inlined_call_operand.vmem [shape: f32[32,2], index: 5, kind: input, shape index: {}]
  %s6 = inlined_call_operand.vmem [shape: f32[32,1], index: 6, kind: input, shape index: {}]
  %s7 = inlined_call_operand.hbm [shape: f32[2,32,256], index: 7, kind: output, shape index: {}]
  %s8 = sld [smem:[#allocation0]]
  $region65: #{tpu_custom_call.1} parent=0
    _
  %s10 = ssub.s32 1, %s8
  %s11 = scalar_select 0, %s10, %s8
  %12 = sst [smem:[#allocation2]] %s0
  $region1: #{tpu_custom_call.1} parent=0
    #allocation3 [shape = 'u8[65536]{0}', space=vmem, size = 0x10000, scoped, tag = 'input window, operand 1']
    #allocation4 [shape = 's32[2]{0}', space=sflag, size = 0x8, scoped, tag = 'scoped memory for tpu_custom_call.1']
    #allocation5 [shape = 's32[2]{0}', space=sflag, size = 0x8, scoped, tag = 'scoped memory for tpu_custom_call.1']
    #allocation6 [shape = 'u8[65536]{0}', space=vmem, size = 0x10000, scoped, tag = 'output window, operand 0']
    %13 = vsyncpa [#allocation4], 0
    %s14 = scalar_lea.sflag [#allocation4], 1
    %15 = vsyncpa %s14, 0
    %16 = vsyncpa [#allocation5], 0
    %s17 = scalar_lea.sflag [#allocation5], 1
    %18 = vsyncpa %s17, 0
    loop: start=0, step=1, limit=4
    $region2: #{tpu_custom_call.1} parent=1 // loop_pre_header
      _
    $region3: #{tpu_custom_call.1} parent=1 // loop_header
      %s20 = sphi 0, %s24
      %p21 = scmp.ge.s32.totalorder %s20, 4
      %s27 = sphi 0, %s39
      %s28 = sphi 0, %s35
      %s29 = sphi 0, %s27
      %s30 = sphi 0, %s28
      %s31 = sphi 0, %s29
      %s32 = sphi 0, %s30
      %s40 = sphi 0, %s40
      %s42 = sphi 0, %s40
      %s43 = sphi 0, %s42
      %s57 = sphi 0, %s43
      %s65 = sphi 0, %s67
      %s68 = sphi 0, %s65
      %s69 = sphi 0, %s68
      %s85 = sphi 0, %s69
      %s93 = sphi 0, %s95
      %s96 = sphi 0, %s93
      %s97 = sphi 0, %s96
      %s113 = sphi 0, %s97
      %s117 = sphi 0, %s117
      %s119 = sphi 0, %s117
      %s120 = sphi 0, %s119
      %s134 = sphi 0, %s120
      %s138 = sphi 0, %s138
      %s140 = sphi 0, %s138
      %s141 = sphi 0, %s140
      %s155 = sphi 0, %s141
      %s159 = sphi 0, %s159
      %s161 = sphi 0, %s159
      %s162 = sphi 0, %s161
      %s176 = sphi 0, %s162
      %s180 = sphi 0, %s180
      %s182 = sphi 0, %s180
      %s183 = sphi 0, %s182
      %s197 = sphi 0, %s183
      %s205 = sphi 0, %s207
      %s208 = sphi 0, %s205
      %s209 = sphi 0, %s208
      %s225 = sphi 0, %s209
    $region4: #{tpu_custom_call.1} parent=1 // loop_header_branch
      %23 = sbr.rel (%p21) target = $region8
    $region5: #{tpu_custom_call.1} parent=1 // loop_body
      %s25 = ssub.s32 %s20, 1
      %s26 = ssub.s32 %s20, 2
      %s33 = sadd.s32 1, %s28
      %p34 = scmp.ge.s32.totalorder %s33, 1
      %s35 = scalar_select %p34, 0, %s33
      %s36 = sadd.s32 1, %s27
      %s37 = scalar_select %p34, %s36, %s27
      %p38 = scmp.ge.s32.totalorder %s37, 2
      %s39 = scalar_select %p38, 0, %s37
      %s41 = sadd.s32 %s40, 1
      %p44 = scmp.eq.s32.totalorder %s20, 1
      %p45 = scmp.ne.s32.totalorder %s40, %s42
      %p46 = scmp.eq.s32.totalorder %s20, 0
      %p47 = por %p45, %p46
      %p48 = scmp.ne.s32.totalorder %s40, %s42
      %p49 = scmp.eq.s32.totalorder %s25, 1
      %p50 = por %p48, %p49
      %p51 = scmp.ne.s32.totalorder %s42, %s43
      %p52 = scmp.eq.s32.totalorder %s25, 0
      %p53 = por %p51, %p52
      %p54 = scmp.ne.s32.totalorder %s42, %s43
      %p55 = scmp.eq.s32.totalorder %s26, 1
      %p56 = por %p54, %p55
      %p58 = scmp.ne.s32.totalorder %s43, %s57
      %p59 = scmp.eq.s32.totalorder %s26, 0
      %p60 = por %p58, %p59
      %s61 = ssub.s32 %s27, %s39
      %s62 = ssub.s32 %s28, %s35
      %s63 = sor.u32 %s61, %s62
      %p64 = scmp.eq.s32.totalorder %s63, 0
      %s66 = sadd.s32 %s65, 1
      %s67 = scalar_select %p64, %s65, %s66
      %p70 = pneg %p64
      %p71 = scmp.eq.s32.totalorder %s20, 1
      %p72 = por %p70, %p71
      %p73 = scmp.ne.s32.totalorder %s65, %s68
      %p74 = scmp.eq.s32.totalorder %s20, 0
      %p75 = por %p73, %p74
      %p76 = scmp.ne.s32.totalorder %s65, %s68
      %p77 = scmp.eq.s32.totalorder %s25, 1
      %p78 = por %p76, %p77
      %p79 = scmp.ne.s32.totalorder %s68, %s69
      %p80 = scmp.eq.s32.totalorder %s25, 0
      %p81 = por %p79, %p80
      %p82 = scmp.ne.s32.totalorder %s68, %s69
      %p83 = scmp.eq.s32.totalorder %s26, 1
      %p84 = por %p82, %p83
      %p86 = scmp.ne.s32.totalorder %s69, %s85
      %p87 = scmp.eq.s32.totalorder %s26, 0
      %p88 = por %p86, %p87
      %s89 = ssub.s32 %s27, %s39
      %s90 = ssub.s32 %s28, %s35
      %s91 = sor.u32 %s89, %s90
      %p92 = scmp.eq.s32.totalorder %s91, 0
      %s94 = sadd.s32 %s93, 1
      %s95 = scalar_select %p92, %s93, %s94
      %p98 = pneg %p92
      %p99 = scmp.eq.s32.totalorder %s20, 1
      %p100 = por %p98, %p99
      %p101 = scmp.ne.s32.totalorder %s93, %s96
      %p102 = scmp.eq.s32.totalorder %s20, 0
      %p103 = por %p101, %p102
      %p104 = scmp.ne.s32.totalorder %s93, %s96
      %p105 = scmp.eq.s32.totalorder %s25, 1
      %p106 = por %p104, %p105
      %p107 = scmp.ne.s32.totalorder %s96, %s97
      %p108 = scmp.eq.s32.totalorder %s25, 0
      %p109 = por %p107, %p108
      %p110 = scmp.ne.s32.totalorder %s96, %s97
      %p111 = scmp.eq.s32.totalorder %s26, 1
      %p112 = por %p110, %p111
      %p114 = scmp.ne.s32.totalorder %s97, %s113
      %p115 = scmp.eq.s32.totalorder %s26, 0
      %p116 = por %p114, %p115
      %s118 = sadd.s32 %s117, 1
      %p121 = scmp.eq.s32.totalorder %s20, 1
      %p122 = scmp.ne.s32.totalorder %s117, %s119
      %p123 = scmp.eq.s32.totalorder %s20, 0
      %p124 = por %p122, %p123
      %p125 = scmp.ne.s32.totalorder %s117, %s119
      %p126 = scmp.eq.s32.totalorder %s25, 1
      %p127 = por %p125, %p126
      %p128 = scmp.ne.s32.totalorder %s119, %s120
      %p129 = scmp.eq.s32.totalorder %s25, 0
      %p130 = por %p128, %p129
      %p131 = scmp.ne.s32.totalorder %s119, %s120
      %p132 = scmp.eq.s32.totalorder %s26, 1
      %p133 = por %p131, %p132
      %p135 = scmp.ne.s32.totalorder %s120, %s134
      %p136 = scmp.eq.s32.totalorder %s26, 0
      %p137 = por %p135, %p136
      %s139 = sadd.s32 %s138, 1
      %p142 = scmp.eq.s32.totalorder %s20, 1
      %p143 = scmp.ne.s32.totalorder %s138, %s140
      %p144 = scmp.eq.s32.totalorder %s20, 0
      %p145 = por %p143, %p144
      %p146 = scmp.ne.s32.totalorder %s138, %s140
      %p147 = scmp.eq.s32.totalorder %s25, 1
      %p148 = por %p146, %p147
      %p149 = scmp.ne.s32.totalorder %s140, %s141
      %p150 = scmp.eq.s32.totalorder %s25, 0
      %p151 = por %p149, %p150
      %p152 = scmp.ne.s32.totalorder %s140, %s141
      %p153 = scmp.eq.s32.totalorder %s26, 1
      %p154 = por %p152, %p153
      %p156 = scmp.ne.s32.totalorder %s141, %s155
      %p157 = scmp.eq.s32.totalorder %s26, 0
      %p158 = por %p156, %p157
      %s160 = sadd.s32 %s159, 1
      %p163 = scmp.eq.s32.totalorder %s20, 1
      %p164 = scmp.ne.s32.totalorder %s159, %s161
      %p165 = scmp.eq.s32.totalorder %s20, 0
      %p166 = por %p164, %p165
      %p167 = scmp.ne.s32.totalorder %s159, %s161
      %p168 = scmp.eq.s32.totalorder %s25, 1
      %p169 = por %p167, %p168
      %p170 = scmp.ne.s32.totalorder %s161, %s162
      %p171 = scmp.eq.s32.totalorder %s25, 0
      %p172 = por %p170, %p171
      %p173 = scmp.ne.s32.totalorder %s161, %s162
      %p174 = scmp.eq.s32.totalorder %s26, 1
      %p175 = por %p173, %p174
      %p177 = scmp.ne.s32.totalorder %s162, %s176
      %p178 = scmp.eq.s32.totalorder %s26, 0
      %p179 = por %p177, %p178
      %s181 = sadd.s32 %s180, 1
      %p184 = scmp.eq.s32.totalorder %s20, 1
      %p185 = scmp.ne.s32.totalorder %s180, %s182
      %p186 = scmp.eq.s32.totalorder %s20, 0
      %p187 = por %p185, %p186
      %p188 = scmp.ne.s32.totalorder %s180, %s182
      %p189 = scmp.eq.s32.totalorder %s25, 1
      %p190 = por %p188, %p189
      %p191 = scmp.ne.s32.totalorder %s182, %s183
      %p192 = scmp.eq.s32.totalorder %s25, 0
      %p193 = por %p191, %p192
      %p194 = scmp.ne.s32.totalorder %s182, %s183
      %p195 = scmp.eq.s32.totalorder %s26, 1
      %p196 = por %p194, %p195
      %p198 = scmp.ne.s32.totalorder %s183, %s197
      %p199 = scmp.eq.s32.totalorder %s26, 0
      %p200 = por %p198, %p199
      %s201 = ssub.s32 %s27, %s39
      %s202 = ssub.s32 %s28, %s35
      %s203 = sor.u32 %s201, %s202
      %p204 = scmp.eq.s32.totalorder %s203, 0
      %s206 = sadd.s32 %s205, 1
      %s207 = scalar_select %p204, %s205, %s206
      %p210 = pneg %p204
      %p211 = scmp.eq.s32.totalorder %s20, 1
      %p212 = por %p210, %p211
      %p213 = scmp.ne.s32.totalorder %s205, %s208
      %p214 = scmp.eq.s32.totalorder %s20, 0
      %p215 = por %p213, %p214
      %p216 = scmp.ne.s32.totalorder %s205, %s208
      %p217 = scmp.eq.s32.totalorder %s25, 1
      %p218 = por %p216, %p217
      %p219 = scmp.ne.s32.totalorder %s208, %s209
      %p220 = scmp.eq.s32.totalorder %s25, 0
      %p221 = por %p219, %p220
      %p222 = scmp.ne.s32.totalorder %s208, %s209
      %p223 = scmp.eq.s32.totalorder %s26, 1
      %p224 = por %p222, %p223
      %p226 = scmp.ne.s32.totalorder %s209, %s225
      %p227 = scmp.eq.s32.totalorder %s26, 0
      %p228 = por %p226, %p227
      %p229 = scmp.le.s32.totalorder 1, %s20
      %p230 = scmp.lt.s32.totalorder %s20, 3
      %p231 = pnand %p229, %p230
      %p232 = pneg %p231
      // Predicated region
      $region9: #{tpu_custom_call.1} parent=5 // pred_check
        _
      $region10: #{tpu_custom_call.1} parent=5 // pred_check_branch
        %234 = sbr.rel (%p231) target = $region12
      $region11: #{tpu_custom_call.1} parent=5 // pred_region
        %s235 = ssub.s32 %s20, 1
        // Predicated region
        $region13: #{tpu_custom_call.1} parent=11 // pred_check
          %p236 = pneg %p53
        $region14: #{tpu_custom_call.1} parent=11 // pred_check_branch
          %238 = sbr.rel (%p236) target = $region16
        $region15: #{tpu_custom_call.1} parent=11 // pred_region
          _
        $region16: #{tpu_custom_call.1} parent=11 // pred_fallthru
          _
        // Predicated region
        $region17: #{tpu_custom_call.1} parent=11 // pred_check
          %p239 = pneg %p130
        $region18: #{tpu_custom_call.1} parent=11 // pred_check_branch
          %241 = sbr.rel (%p239) target = $region20
        $region19: #{tpu_custom_call.1} parent=11 // pred_region
          _
        $region20: #{tpu_custom_call.1} parent=11 // pred_fallthru
          _
        // Predicated region
        $region21: #{tpu_custom_call.1} parent=11 // pred_check
          %p242 = pneg %p151
        $region22: #{tpu_custom_call.1} parent=11 // pred_check_branch
          %244 = sbr.rel (%p242) target = $region24
        $region23: #{tpu_custom_call.1} parent=11 // pred_region
          _
        $region24: #{tpu_custom_call.1} parent=11 // pred_fallthru
          _
        // Predicated region
        $region25: #{tpu_custom_call.1} parent=11 // pred_check
          %p245 = pneg %p172
        $region26: #{tpu_custom_call.1} parent=11 // pred_check_branch
          %247 = sbr.rel (%p245) target = $region28
        $region27: #{tpu_custom_call.1} parent=11 // pred_region
          _
        $region28: #{tpu_custom_call.1} parent=11 // pred_fallthru
          _
        // Predicated region
        $region29: #{tpu_custom_call.1} parent=11 // pred_check
          %p248 = pneg %p193
        $region30: #{tpu_custom_call.1} parent=11 // pred_check_branch
          %250 = sbr.rel (%p248) target = $region32
        $region31: #{tpu_custom_call.1} parent=11 // pred_region
          _
        $region32: #{tpu_custom_call.1} parent=11 // pred_fallthru
          _
      $region12: #{tpu_custom_call.1} parent=5 // pred_fallthru
        _
      %p251 = scmp.lt.s32.totalorder %s20, 2
      // Predicated region
      $region33: #{tpu_custom_call.1} parent=5 // pred_check
        %p252 = pneg %p251
      $region34: #{tpu_custom_call.1} parent=5 // pred_check_branch
        %254 = sbr.rel (%p252) target = $region36
      $region35: #{tpu_custom_call.1} parent=5 // pred_region
        // Predicated region
        $region37: #{tpu_custom_call.1} parent=35 // pred_check
          %p255 = pneg %p75
        $region38: #{tpu_custom_call.1} parent=35 // pred_check_branch
          %257 = sbr.rel (%p255) target = $region40
        $region39: #{tpu_custom_call.1} parent=35 // pred_region
          %s258 = sand.u32 %s65, 1
          %s259 = scalar_lea.sflag [#allocation4], %s258
          %s260 = sand.u32 %s65, 1
          %s261 = smul.addr %s260, 64
          %s262 = scalar_lea.vmem [#allocation3], %s261
          %s263 = smul.u32 2, %s28
          %s265 = ssub.s32 1024, 1024
          %266 = vsyncadd %s259, %s265
          %s267 = smul.addr %s27, 8
          %s268 = sadd.s32 %s263, %s267
          %s269 = smul.addr %s268, 128
          %s270 = scalar_lea.hbm %s1, %s269
          %s271 = sshll.u32 %s262, 4
          %s272 = int_to_ptr.vmem [resolvable:$true] %s271
          %277 = dma.hbm_to_vmem [thread:$0]  %s270, 1024, %s272, %s259, 256, 256, 16
        $region40: #{tpu_custom_call.1} parent=35 // pred_fallthru
          _
        // Predicated region
        $region41: #{tpu_custom_call.1} parent=35 // pred_check
          %p278 = pneg %p103
        $region42: #{tpu_custom_call.1} parent=35 // pred_check_branch
          %280 = sbr.rel (%p278) target = $region44
        $region43: #{tpu_custom_call.1} parent=35 // pred_region
          %s281 = smul.u32 2, %s28
          %p282 = scmp.lt.s32.totalorder %s27, 1
          %s283 = scalar_select %p282, %s27, 1
          %p284 = scmp.lt.s32.totalorder %s281, 1
          %s285 = scalar_select %p284, %s281, 1
          %s286 = smul.addr %s283, 2
          %s287 = sadd.s32 %s285, %s286
          %s288 = scalar_lea.vmem %s2, %s287
          %s289 = smul.u32 2, %s28
        $region44: #{tpu_custom_call.1} parent=35 // pred_fallthru
          _
      $region36: #{tpu_custom_call.1} parent=5 // pred_fallthru
        _
      %p290 = scmp.le.s32.totalorder 1, %s20
      %p291 = scmp.lt.s32.totalorder %s20, 3
      %p292 = pnand %p290, %p291
      %p293 = pneg %p292
      // Predicated region
      $region45: #{tpu_custom_call.1} parent=5 // pred_check
        _
      $region46: #{tpu_custom_call.1} parent=5 // pred_check_branch
        %295 = sbr.rel (%p292) target = $region48
      $region47: #{tpu_custom_call.1} parent=5 // pred_region
        %s296 = ssub.s32 %s20, 1
        %s297 = sand.u32 %s68, 1
        %s298 = scalar_lea.sflag [#allocation4], %s297
        %s299 = sand.u32 %s68, 1
        %s300 = smul.addr %s299, 64
        %s301 = scalar_lea.vmem [#allocation3], %s300
        // Predicated region
        $region49: #{tpu_custom_call.1} parent=47 // pred_check
          %p302 = pneg %p81
        $region50: #{tpu_custom_call.1} parent=47 // pred_check_branch
          %304 = sbr.rel (%p302) target = $region52
        $region51: #{tpu_custom_call.1} parent=47 // pred_region
          %305 = dma.done %s298, 1024
        $region52: #{tpu_custom_call.1} parent=47 // pred_fallthru
          _
        %p306 = pneg %p53
        %p307 = pneg %p50
        %s308 = sand.u32 %s68, 1
        %s309 = scalar_lea.sflag [#allocation4], %s308
        %s310 = sand.u32 %s68, 1
        %s311 = smul.addr %s310, 64
        %s312 = scalar_lea.vmem [#allocation3], %s311
        %p313 = pneg %p81
        %p314 = pneg %p78
        %s315 = smul.u32 2, %s30
        %p316 = scmp.lt.s32.totalorder %s29, 1
        %s317 = scalar_select %p316, %s29, 1
        %p318 = scmp.lt.s32.totalorder %s315, 1
        %s319 = scalar_select %p318, %s315, 1
        %s320 = smul.addr %s317, 2
        %s321 = sadd.s32 %s319, %s320
        %s322 = scalar_lea.vmem %s2, %s321
        %p323 = pneg %p109
        %p324 = pneg %p106
        %p325 = pneg %p130
        %p326 = pneg %p127
        %p327 = pneg %p151
        %p328 = pneg %p148
        %p329 = pneg %p172
        %p330 = pneg %p169
        %p331 = pneg %p193
        %p332 = pneg %p190
        %p333 = pneg %p221
        %p334 = pneg %p218
        %s335 = sand.u32 %s208, 1
        %s336 = scalar_lea.sflag [#allocation5], %s335
        %s337 = sand.u32 %s208, 1
        %s338 = smul.addr %s337, 64
        %s339 = scalar_lea.vmem [#allocation6], %s338
        %s340 = smul.u32 2, %s30
        %s341 = smul.u32 2, %s30
        %p342 = scmp.lt.s32.totalorder %s29, 1
        %s343 = scalar_select %p342, %s29, 1
        %p344 = scmp.lt.s32.totalorder %s341, 1
        %s345 = scalar_select %p344, %s341, 1
        %s346 = smul.addr %s343, 2
        %s347 = sadd.s32 %s345, %s346
        %s348 = scalar_lea.vmem %s2, %s347
        %s349 = smul.u32 2, %s30
        %s350 = smul.u32 2, %s30
        %v351 = vld [vmem:[%s301] sm:$0xff]
        %v352 = vld [vmem:[%s301 + $0x8] sm:$0xff]
        %v353 = vld [vmem:[%s301 + $0x10] sm:$0xff]
        %v354 = vld [vmem:[%s301 + $0x18] sm:$0xff]
        %v355 = vld [vmem:[%s301 + $0x20] sm:$0xff]
        %v356 = vld [vmem:[%s301 + $0x28] sm:$0xff]
        %v357 = vld [vmem:[%s301 + $0x30] sm:$0xff]
        %v358 = vld [vmem:[%s301 + $0x38] sm:$0xff]
        %v359 = vld [vmem:[%s348] sm:$0x3]
        %s360 = sld [smem:[#allocation2]]
        %vm361 = vcmp.ge.f32.partialorder %v359, 1.0
        %v362 = vstv %s360
        %v363 = vsel %vm361, 1.0, %v362
        %v364 = vld [vmem:[%s3] sm:$0x3]
        %v365 = vld [vmem:[%s4] sm:$0x3]
        %367 = vset.pattern.permute.xlu0 0
        %368 = vperm.xlu0 %367, %v365
        %v369 = vpop.permute.xlu0 %368
        %vm371 = vcmask 261120
        %v373 = vsel %vm371, %v364, 0
        %375 = vmatprep.subr.mxu0 0.0
        %376 = vmatpush1.msra.mxu0 0.0
        %377 = vmatprep.subr.mxu0 0.0
        %378 = vmatpush1.msra.mxu0 0.0
        %379 = vmatprep.subr.mxu0 0.0
        %380 = vmatpush1.msra.mxu0 0.0
        %381 = vmatprep.subr.mxu0 0.0
        %382 = vmatpush1.msra.mxu0 0.0
        %383 = vmatprep.subr.mxu0 0.0
        %384 = vmatpush1.msra.mxu0 0.0
        %385 = vmatprep.subr.mxu0 0.0
        %386 = vmatpush1.msra.mxu0 0.0
        %387 = vmatprep.subr.mxu0 0.0
        %388 = vmatpush1.msra.mxu0 0.0
        %389 = vmatprep.subr.mxu0 0.0
        %390 = vmatpush1.msra.mxu0 0.0
        %391 = vmatprep.subr.mxu0 0.0
        %392 = vmatpush1.msra.mxu0 0.0
        %393 = vmatprep.subr.mxu0 0.0
        %394 = vmatpush1.msra.mxu0 0.0
        %395 = vmatprep.subr.mxu0 0.0
        %396 = vmatpush1.msra.mxu0 0.0
        %397 = vmatprep.subr.mxu0 0.0
        %398 = vmatpush1.msra.mxu0 0.0
        %399 = vmatprep.subr.mxu0 %v358
        %400 = vmatpush1.msra.mxu0 %v357
        %401 = vmatprep.subr.mxu0 %v356
        %402 = vmatpush1.msra.mxu0 %v355
        %403 = vmatprep.subr.mxu0 %v354
        %404 = vmatpush1.msra.mxu0 %v353
        %405 = vmatprep.subr.mxu0 %v352
        %406 = vmatpush1.msra.mxu0 %v351
        %407 = vmatprep.subr.mxu0 0.0
        %408 = vmatpush2.msra.mxu0 0.0
        %409 = vmatprep.subr.mxu0 0.0
        %410 = vmatpush2.msra.mxu0 0.0
        %411 = vmatprep.subr.mxu0 0.0
        %412 = vmatpush2.msra.mxu0 0.0
        %413 = vmatprep.subr.mxu0 0.0
        %414 = vmatpush2.msra.mxu0 0.0
        %415 = vmatprep.subr.mxu0 0.0
        %416 = vmatpush2.msra.mxu0 0.0
        %417 = vmatprep.subr.mxu0 0.0
        %418 = vmatpush2.msra.mxu0 0.0
        %419 = vmatprep.subr.mxu0 0.0
        %420 = vmatpush2.msra.mxu0 0.0
        %421 = vmatprep.subr.mxu0 0.0
        %422 = vmatpush2.msra.mxu0 0.0
        %423 = vmatprep.subr.mxu0 0.0
        %424 = vmatpush2.msra.mxu0 0.0
        %425 = vmatprep.subr.mxu0 0.0
        %426 = vmatpush2.msra.mxu0 0.0
        %427 = vmatprep.subr.mxu0 0.0
        %428 = vmatpush2.msra.mxu0 0.0
        %429 = vmatprep.subr.mxu0 0.0
        %430 = vmatpush2.msra.mxu0 0.0
        %431 = vmatprep.subr.mxu0 0.0
        %432 = vmatpush2.msra.mxu0 0.0
        %433 = vmatprep.subr.mxu0 0.0
        %434 = vmatpush2.msra.mxu0 0.0
        %435 = vmatprep.subr.mxu0 0.0
        %436 = vmatpush2.msra.mxu0 0.0
        %437 = vmatprep.subr.mxu0 0.0
        %438 = vmatpush2.msra.mxu0 0.0
        %439 = vmatprep.mubr.f32.mxu0 0.0
        %440 = vmatmul.mubr.f32.gmra.mxu0 %v373
        %v441 = vpop.f32.mrf.mxu0
        %v442 = vadd.f32 %v369, %v441
        %v443 = vpop.f32.mrf.mxu0
        %v444 = vadd.f32 %v369, %v443
        %445 = vdwg.mxu0
        %v446 = vmax.f32 %v442, 0.0
        %v447 = vmax.f32 %v444, 0.0
        %v448 = vld [vmem:[%s5] sm:$0xff]
        %v449 = vld [vmem:[%s5 + $0x8] sm:$0xff]
        %v450 = vld [vmem:[%s5 + $0x10] sm:$0xff]
        %v451 = vld [vmem:[%s5 + $0x18] sm:$0xff]
        %v452 = vld [vmem:[%s6] sm:$0xff]
        %v453 = vld [vmem:[%s6 + $0x8] sm:$0xff]
        %v454 = vld [vmem:[%s6 + $0x10] sm:$0xff]
        %v455 = vld [vmem:[%s6 + $0x18] sm:$0xff]
        %457 = vset.pattern.permute.xlu0 0
        %458 = vperm.xlu0 %457, %v452
        %v459 = vpop.permute.xlu0 %458
        %462 = vset.pattern.permute.xlu0 0
        %463 = vperm.xlu0 %462, %v453
        %v464 = vpop.permute.xlu0 %463
        %467 = vset.pattern.permute.xlu0 0
        %468 = vperm.xlu0 %467, %v454
        %v469 = vpop.permute.xlu0 %468
        %472 = vset.pattern.permute.xlu0 0
        %473 = vperm.xlu0 %472, %v455
        %v474 = vpop.permute.xlu0 %473
        %vm476 = vcmask 15360
        %v478 = vsel %vm476, %v448, 0
        %v481 = vsel %vm476, %v449, 0
        %v484 = vsel %vm476, %v450, 0
        %v487 = vsel %vm476, %v451, 0
        %vm489 = vcmask 1041408
        %v491 = vsel %vm489, %v446, 0
        %v494 = vsel %vm489, %v447, 0
        %496 = vmatprep.subr.mxu0 0.0
        %497 = vmatpush1.msra.mxu0 0.0
        %498 = vmatprep.subr.mxu0 0.0
        %499 = vmatpush1.msra.mxu0 0.0
        %500 = vmatprep.subr.mxu0 0.0
        %501 = vmatpush1.msra.mxu0 0.0
        %502 = vmatprep.subr.mxu0 0.0
        %503 = vmatpush1.msra.mxu0 0.0
        %504 = vmatprep.subr.mxu0 0.0
        %505 = vmatpush1.msra.mxu0 0.0
        %506 = vmatprep.subr.mxu0 0.0
        %507 = vmatpush1.msra.mxu0 0.0
        %508 = vmatprep.subr.mxu0 0.0
        %509 = vmatpush1.msra.mxu0 0.0
        %510 = vmatprep.subr.mxu0 0.0
        %511 = vmatpush1.msra.mxu0 0.0
        %512 = vmatprep.subr.mxu0 0.0
        %513 = vmatpush1.msra.mxu0 0.0
        %514 = vmatprep.subr.mxu0 0.0
        %515 = vmatpush1.msra.mxu0 0.0
        %516 = vmatprep.subr.mxu0 0.0
        %517 = vmatpush1.msra.mxu0 0.0
        %518 = vmatprep.subr.mxu0 0.0
        %519 = vmatpush1.msra.mxu0 0.0
        %520 = vmatprep.subr.mxu0 0.0
        %521 = vmatpush1.msra.mxu0 0.0
        %522 = vmatprep.subr.mxu0 0.0
        %523 = vmatpush1.msra.mxu0 0.0
        %524 = vmatprep.subr.mxu0 0.0
        %525 = vmatpush1.msra.mxu0 0.0
        %526 = vmatprep.subr.mxu0 %v494
        %527 = vmatpush1.msra.mxu0 %v491
        %528 = vmatprep.subr.mxu0 0.0
        %529 = vmatpush2.msra.mxu0 0.0
        %530 = vmatprep.subr.mxu0 0.0
        %531 = vmatpush2.msra.mxu0 0.0
        %532 = vmatprep.subr.mxu0 0.0
        %533 = vmatpush2.msra.mxu0 0.0
        %534 = vmatprep.subr.mxu0 0.0
        %535 = vmatpush2.msra.mxu0 0.0
        %536 = vmatprep.subr.mxu0 0.0
        %537 = vmatpush2.msra.mxu0 0.0
        %538 = vmatprep.subr.mxu0 0.0
        %539 = vmatpush2.msra.mxu0 0.0
        %540 = vmatprep.subr.mxu0 0.0
        %541 = vmatpush2.msra.mxu0 0.0
        %542 = vmatprep.subr.mxu0 0.0
        %543 = vmatpush2.msra.mxu0 0.0
        %544 = vmatprep.subr.mxu0 0.0
        %545 = vmatpush2.msra.mxu0 0.0
        %546 = vmatprep.subr.mxu0 0.0
        %547 = vmatpush2.msra.mxu0 0.0
        %548 = vmatprep.subr.mxu0 0.0
        %549 = vmatpush2.msra.mxu0 0.0
        %550 = vmatprep.subr.mxu0 0.0
        %551 = vmatpush2.msra.mxu0 0.0
        %552 = vmatprep.subr.mxu0 0.0
        %553 = vmatpush2.msra.mxu0 0.0
        %554 = vmatprep.subr.mxu0 0.0
        %555 = vmatpush2.msra.mxu0 0.0
        %556 = vmatprep.subr.mxu0 0.0
        %557 = vmatpush2.msra.mxu0 0.0
        %558 = vmatprep.subr.mxu0 0.0
        %559 = vmatpush2.msra.mxu0 0.0
        %560 = vmatprep.mubr.f32.mxu0 0.0
        %561 = vmatmul.mubr.f32.gmra.mxu0 %v478
        %v562 = vpop.f32.mrf.mxu0
        %v563 = vadd.f32 %v459, %v562
        %v564 = vpop.f32.mrf.mxu0
        %v565 = vadd.f32 %v459, %v564
        %566 = vmatprep.mubr.f32.mxu0 0.0
        %567 = vmatmul.mubr.f32.gmra.mxu0 %v481
        %v568 = vpop.f32.mrf.mxu0
        %v569 = vadd.f32 %v464, %v568
        %v570 = vpop.f32.mrf.mxu0
        %v571 = vadd.f32 %v464, %v570
        %572 = vmatprep.mubr.f32.mxu0 0.0
        %573 = vmatmul.mubr.f32.gmra.mxu0 %v484
        %v574 = vpop.f32.mrf.mxu0
        %v575 = vadd.f32 %v469, %v574
        %v576 = vpop.f32.mrf.mxu0
        %v577 = vadd.f32 %v469, %v576
        %578 = vmatprep.mubr.f32.mxu0 0.0
        %579 = vmatmul.mubr.f32.gmra.mxu0 %v487
        %v580 = vpop.f32.mrf.mxu0
        %v581 = vadd.f32 %v474, %v580
        %v582 = vpop.f32.mrf.mxu0
        %v583 = vadd.f32 %v474, %v582
        %584 = vdwg.mxu0
        %v585 = vmax.f32 %v563, 0.0
        %v586 = vmax.f32 %v565, 0.0
        %v587 = vmax.f32 %v569, 0.0
        %v588 = vmax.f32 %v571, 0.0
        %v589 = vmax.f32 %v575, 0.0
        %v590 = vmax.f32 %v577, 0.0
        %v591 = vmax.f32 %v581, 0.0
        %v592 = vmax.f32 %v583, 0.0
        %v594 = vlaneseq
        %v595 = vshrl.u32 %v594, 7
        %v596 = vsub.s32 0, %v595
        %v597 = vrot.slane %v363, %v596
        %v598 = vlaneseq
        %v599 = vshrl.u32 %v598, 7
        %v600 = vsub.s32 1, %v599
        %v601 = vrot.slane %v363, %v600
        %v604 = vmul.f32 %v585, %v597
        %v605 = vmul.f32 %v586, %v601
        %v606 = vmul.f32 %v587, %v597
        %v607 = vmul.f32 %v588, %v601
        %v608 = vmul.f32 %v589, %v597
        %v609 = vmul.f32 %v590, %v601
        %v610 = vmul.f32 %v591, %v597
        %v611 = vmul.f32 %v592, %v601
        %v612 = vmul.f32 %v604, %v351
        %v613 = vmul.f32 %v605, %v352
        %v614 = vmul.f32 %v606, %v353
        %v615 = vmul.f32 %v607, %v354
        %v616 = vmul.f32 %v608, %v355
        %v617 = vmul.f32 %v609, %v356
        %v618 = vmul.f32 %v610, %v357
        %v619 = vmul.f32 %v611, %v358
        %620 = vst [vmem:[%s339] sm:$0xff] %v612
        %621 = vst [vmem:[%s339 + $0x8] sm:$0xff] %v613
        %622 = vst [vmem:[%s339 + $0x10] sm:$0xff] %v614
        %623 = vst [vmem:[%s339 + $0x18] sm:$0xff] %v615
        %624 = vst [vmem:[%s339 + $0x20] sm:$0xff] %v616
        %625 = vst [vmem:[%s339 + $0x28] sm:$0xff] %v617
        %626 = vst [vmem:[%s339 + $0x30] sm:$0xff] %v618
        %627 = vst [vmem:[%s339 + $0x38] sm:$0xff] %v619
        %s628 = sand.u32 %s208, 1
        %s629 = scalar_lea.sflag [#allocation5], %s628
        %s630 = sand.u32 %s208, 1
        %s631 = smul.addr %s630, 64
        %s632 = scalar_lea.vmem [#allocation6], %s631
        // Predicated region
        $region53: #{tpu_custom_call.1} parent=47 // pred_check
          %p633 = pneg %p218
        $region54: #{tpu_custom_call.1} parent=47 // pred_check_branch
          %635 = sbr.rel (%p633) target = $region56
        $region55: #{tpu_custom_call.1} parent=47 // pred_region
          %s636 = smul.u32 2, %s30
          %s638 = ssub.s32 1024, 1024
          %639 = vsyncadd %s629, %s638
          %s640 = smul.addr %s29, 8
          %s641 = sadd.s32 %s636, %s640
          %s642 = smul.addr %s641, 128
          %s643 = scalar_lea.hbm %s7, %s642
          %s644 = sshll.u32 %s632, 4
          %s645 = int_to_ptr.vmem [resolvable:$true] %s644
          %650 = dma.vmem_to_hbm [thread:$0]  %s645, 1024, %s643, %s629, 256, 256, 16
        $region56: #{tpu_custom_call.1} parent=47 // pred_fallthru
          _
      $region48: #{tpu_custom_call.1} parent=5 // pred_fallthru
        _
      %p651 = scmp.le.s32.totalorder 2, %s20
      // Predicated region
      $region57: #{tpu_custom_call.1} parent=5 // pred_check
        %p652 = pneg %p651
      $region58: #{tpu_custom_call.1} parent=5 // pred_check_branch
        %654 = sbr.rel (%p652) target = $region60
      $region59: #{tpu_custom_call.1} parent=5 // pred_region
        %s655 = ssub.s32 %s20, 2
        // Predicated region
        $region61: #{tpu_custom_call.1} parent=59 // pred_check
          %p656 = pneg %p224
        $region62: #{tpu_custom_call.1} parent=59 // pred_check_branch
          %658 = sbr.rel (%p656) target = $region64
        $region63: #{tpu_custom_call.1} parent=59 // pred_region
          %s659 = sand.u32 %s209, 1
          %s660 = scalar_lea.sflag [#allocation5], %s659
          %s661 = sand.u32 %s209, 1
          %s662 = smul.addr %s661, 64
          %s663 = scalar_lea.vmem [#allocation6], %s662
          %664 = dma.done %s660, 1024
        $region64: #{tpu_custom_call.1} parent=59 // pred_fallthru
          _
      $region60: #{tpu_custom_call.1} parent=5 // pred_fallthru
        _
    $region6: #{tpu_custom_call.1} parent=1 // loop_footer
      %s24 = sadd.s32 1, %s20
    $region7: #{tpu_custom_call.1} parent=1 // loop_footer_branch
      %19 = sbr.rel target = $region3
    $region8: #{tpu_custom_call.1} parent=1 // loop_exit
      _
    %665 = vsyncpa [#allocation4], 1
    %s666 = scalar_lea.sflag [#allocation4], 1
    %667 = vsyncpa %s666, 1
    %668 = vsyncpa [#allocation5], 1
    %s669 = scalar_lea.sflag [#allocation5], 1
    %670 = vsyncpa %s669, 1

</llo_original>
